<compile_context>
chip_gen: v6e
topology: v6e:2x2x1
jax: 0.10.0
libtpu: 0.0.40
codegen_flags: <defaults>
</compile_context>

<pallas_src>
import functools

import jax
import jax.numpy as jnp
from jax import lax
from jax.experimental import pallas as pl
from jax.experimental.pallas import tpu as pltpu


def _round_up(x, m):
    return (x + m - 1) // m * m


def _sublane_multiple(dtype):
    itemsize = jnp.dtype(dtype).itemsize
    if itemsize >= 4:
        return 8
    if itemsize == 2:
        return 16
    return 32


def _vmem_limit_bytes():
    """Scoped-VMEM limit: 3/4 of physical, capped at 96 MiB (v5e/v6e: 128 MiB
    physical -> 96 MiB; v7x: 64 MiB physical -> 48 MiB)."""
    try:
        phys = int(pltpu.get_tpu_info().vmem_capacity_bytes)
    except Exception:  # no device / attr mismatch: assume v7x-sized VMEM
        phys = 64 * 1024 * 1024
    return min(phys * 3 // 4, 96 * 1024 * 1024)


def _choose_s_tile(s, e, dtype, *, vmem_budget_bytes):
    """Pick the token-tile TS against *physical* VMEM, padding-aware.

    Per-token VMEM cost accounted:
      x tile        : 2 (Pallas double-buffer) * round_up(E,128) * itemsize
      masked x copy : 1 * round_up(E,128) * itemsize   (tail-mask path)
      (K,TS) f32 s/p intermediates (K padded to 8, a few live): ~128 B/token
    W, output and the (K,E) accumulator are tiny and covered by headroom.
    """
    itemsize = jnp.dtype(dtype).itemsize
    e_pad = _round_up(e, 128)
    per_token = 3 * e_pad * itemsize + 128
    align = _sublane_multiple(dtype)

    ts = max(align, (vmem_budget_bytes // per_token) // align * align)
    # Never use a tile larger than (alignment-padded) S itself.
    ts = min(ts, _round_up(s, align))
    return ts


def _token_select_kernel(x_ref, w_ref, o_ref, m_sc, l_sc, acc_sc, *,
                         s_total, ts):
    """One (batch, S-tile) grid step.

    x_ref : (TS, E)   token slab (native dtype; leading batch dim squeezed)
    w_ref : (Kp, E)   score weights, pre-scaled by 1/tau, K padded to mult of 8
    o_ref : (Kp, E)   output block (written only on the last S-tile)
    m_sc  : (Kp, 1) f32  running max            (online softmax)
    l_sc  : (Kp, 1) f32  running sum of exp
    acc_sc: (Kp, E) f32  running unnormalized weighted sum of tokens
    """
    si = pl.program_id(1)

    @pl.when(si == 0)
    def _():
        m_sc[...] = jnp.full_like(m_sc, -jnp.inf)
        l_sc[...] = jnp.zeros_like(l_sc)
        acc_sc[...] = jnp.zeros_like(acc_sc)

    x = x_ref[...]                                          # (TS, E)

    needs_mask = (s_total % ts) != 0                        # static Python bool
    if needs_mask:
        remaining = s_total - si * ts                       # scalar (>= 1)
        lane_ids = lax.broadcasted_iota(jnp.int32, (1, ts), 1)   # (1, TS)
        valid_lanes = lane_ids < remaining                  # token mask (lanes)
        # Zero OOB token rows: the padded part of the VMEM buffer may hold
        # stale NaN/Inf garbage and 0 * NaN = NaN would poison both matmuls.
        row_ids = lax.broadcasted_iota(jnp.int32, (ts, 1), 0)    # (TS, 1)
        x = jnp.where(row_ids < remaining, x, jnp.zeros_like(x))

    # scores^T: (Kp, TS) = W(Kp,E) . x(TS,E) contracting E.  top_k on
    # sublanes, tokens on lanes -> softmax reduction is lane-dense.
    s = lax.dot_general(
        w_ref[...], x,
        dimension_numbers=(((1,), (1,)), ((), ())),
        preferred_element_type=jnp.float32,
    )                                                       # (Kp, TS) f32
    if needs_mask:
        s = jnp.where(valid_lanes, s, -jnp.inf)

    # Online softmax over the token (lane) axis; p stays unnormalized.
    m_prev = m_sc[...]                                      # (Kp, 1)
    m_new = jnp.maximum(m_prev, jnp.max(s, axis=-1, keepdims=True))
    alpha = jnp.exp(m_prev - m_new)                         # (Kp, 1)
    p = jnp.exp(s - m_new)                                  # (Kp, TS)
    if needs_mask:
        p = jnp.where(valid_lanes, p, 0.0)                  # exact zero weight
    l_sc[...] = alpha * l_sc[...] + jnp.sum(p, axis=-1, keepdims=True)
    acc_sc[...] = alpha * acc_sc[...] + lax.dot_general(
        p.astype(x.dtype), x,
        dimension_numbers=(((1,), (0,)), ((), ())),
        preferred_element_type=jnp.float32,
    )                                                       # (Kp, E)
    m_sc[...] = m_new

    @pl.when(si == pl.num_programs(1) - 1)
    def _():
        inv_l = pl.reciprocal(l_sc[...], approx=False)
        o_ref[...] = (acc_sc[...] * inv_l).astype(o_ref.dtype)


def differentiable_token_selection(x, weight, bias, *, tau=1.0, s_tile=None):
    """x: (B, T, N, E); weight: (top_k, E) [PyTorch Linear layout]; bias: (top_k,)."""
    b, t, n, e = x.shape
    top_k = weight.shape[0]
    s = t * n
    del bias  # per-k constant cancels exactly in the softmax over the S axis

    x_flat = x.reshape(b, s, e)                             # native dtype
    itemsize = jnp.dtype(x_flat.dtype).itemsize

    # Pad top_k to a sublane-full multiple of 8; padded rows use zero weights
    # and their (harmless) outputs are sliced off below.
    kp = _round_up(top_k, 8)
    inv_tau = 1.0 / float(tau)
    w = jnp.asarray(weight, jnp.float32) * inv_tau          # fold 1/tau into W
    if kp != top_k:
        w = jnp.concatenate([w, jnp.zeros((kp - top_k, e), jnp.float32)], 0)
    w = w.astype(x.dtype)                                   # (Kp, E)

    vmem_limit = _vmem_limit_bytes()
    budget = vmem_limit - max(8 * 1024 * 1024, vmem_limit // 8)
    if s_tile is None:
        ts = _choose_s_tile(s, e, x_flat.dtype, vmem_budget_bytes=budget)
    else:
        ts = _round_up(int(s_tile), _sublane_multiple(x_flat.dtype))
    grid = (b, pl.cdiv(s, ts))

    cost = pl.CostEstimate(
        flops=4 * b * s * e * kp,
        transcendentals=b * s * kp,
        bytes_accessed=(b * s * e * itemsize                # stream x once
                        + kp * e * itemsize                 # weights
                        + b * kp * e * itemsize),           # output
    )

    kernel = functools.partial(_token_select_kernel, s_total=s, ts=ts)

    out = pl.pallas_call(
        kernel,
        out_shape=jax.ShapeDtypeStruct((b, kp, e), x.dtype),
        grid_spec=pltpu.PrefetchScalarGridSpec(
            num_scalar_prefetch=0,
            grid=grid,
            in_specs=[
                pl.BlockSpec((pl.Squeezed(), ts, e), lambda bi, si: (bi, si, 0)),
                pl.BlockSpec((kp, e), lambda bi, si: (0, 0)),
            ],
            out_specs=pl.BlockSpec((pl.Squeezed(), kp, e),
                                   lambda bi, si: (bi, 0, 0)),
            scratch_shapes=[
                pltpu.VMEM((kp, 1), jnp.float32),           # m (running max)
                pltpu.VMEM((kp, 1), jnp.float32),           # l (running denom)
                pltpu.VMEM((kp, e), jnp.float32),           # acc
            ],
        ),
        compiler_params=pltpu.CompilerParams(
            dimension_semantics=("parallel", "arbitrary"),
            vmem_limit_bytes=vmem_limit,
        ),
        cost_estimate=cost,
    )(x_flat, w)

    return out[:, :top_k, :] if kp != top_k else out


def _reference(x, weight, bias, tau=1.0):
    b, t, n, e = x.shape
    top_k = weight.shape[0]
    scores = jnp.einsum("btne,ke->btnk", x, weight) + bias
    scores = scores.reshape(b, t * n, top_k) / tau
    w = jax.nn.softmax(scores, axis=1)                      # (B, S, K)
    x_flat = x.reshape(b, t * n, e)
    return jnp.einsum("bsk,bse->bke", w, x_flat)


if __name__ == "__main__":
    key = jax.random.PRNGKey(0)
    kx, kw, kb, kx2 = jax.random.split(key, 4)

    B, T, N, E = 2, 2, 8, 32
    TOP_K = 4
    TAU = 0.75

    x = jax.random.normal(kx, (B, T, N, E), dtype=jnp.float32)
    bound = 1.0 / (E ** 0.5)
    weight = jax.random.uniform(kw, (TOP_K, E), jnp.float32, -bound, bound)
    bias = jax.random.uniform(kb, (TOP_K,), jnp.float32, -bound, bound)

    # Case 1: S a multiple of the tile (no masking path).
    out = jax.block_until_ready(differentiable_token_selection(x, weight, bias, tau=TAU))
    ref = _reference(x, weight, bias, tau=TAU)
    assert out.shape == (B, TOP_K, E)
    assert jnp.allclose(out, ref, atol=1e-5, rtol=1e-5)

    # Case 2: awkward S (20 tokens) -> partial tail tile, exercises masking.
    x2 = jax.random.normal(kx2, (B, 2, 10, E), dtype=jnp.float32)
    out2 = jax.block_until_ready(differentiable_token_selection(x2, weight, bias, tau=TAU))
    ref2 = _reference(x2, weight, bias, tau=TAU)
    assert jnp.allclose(out2, ref2, atol=1e-5, rtol=1e-5)

    # Case 3: forced small tile -> multi-step online softmax + partial tail.
    out3 = jax.block_until_ready(
        differentiable_token_selection(x2, weight, bias, tau=TAU, s_tile=8))
    assert jnp.allclose(out3, ref2, atol=1e-5, rtol=1e-5)

    print("KERNEL_OK")
</pallas_src>

<mosaic_0001>
module attributes {stable_mosaic.version = 11 : i64} {
  func.func @_token_select_kernel(%arg0: i32, %arg1: i32, %arg2: memref<1x16x32xf32, #tpu.memory_space<vmem>>, %arg3: memref<8x32xf32, #tpu.memory_space<vmem>>, %arg4: memref<1x8x32xf32, #tpu.memory_space<vmem>>, %arg5: memref<8x1xf32, #tpu.memory_space<vmem>>, %arg6: memref<8x1xf32, #tpu.memory_space<vmem>>, %arg7: memref<8x32xf32, #tpu.memory_space<vmem>>) attributes {dimension_semantics = [#tpu.dimension_semantics<parallel>, #tpu.dimension_semantics<arbitrary>], iteration_bounds = array<i64: 2, 1>, scalar_prefetch = 0 : i64, scratch_operands = 3 : i64, tpu.core_type = #tpu.core_type<tc>, window_params = [{transform_indices = @transform_0, window_bounds = array<i64: 1, 16, 32>}, {pipeline_mode = #tpu.pipeline_mode<synchronous>, transform_indices = @transform_1, window_bounds = array<i64: 8, 32>}, {transform_indices = @transform_2, window_bounds = array<i64: 1, 8, 32>}]} {
    %c0_i32 = arith.constant 0 : i32
    %0 = arith.cmpi eq, %arg1, %c0_i32 : i32
    %1 = arith.extui %0 : i1 to i32
    %c0_i32_0 = arith.constant 0 : i32
    %2 = arith.cmpi ne, %1, %c0_i32_0 : i32
    scf.if %2 {
      %cst_22 = arith.constant 0xFF800000 : f32
      %32 = vector.broadcast %cst_22 : f32 to vector<8x1xf32>
      %c0_23 = arith.constant 0 : index
      %c0_24 = arith.constant 0 : index
      %33 = vector.load %arg5[%c0_23, %c0_24] : memref<8x1xf32, #tpu.memory_space<vmem>>, vector<8x1xf32>
      tpu.vector_store %arg5[%c0_23, %c0_24], %32 {strides = array<i32>} : memref<8x1xf32, #tpu.memory_space<vmem>>, vector<8x1xf32>,
      %cst_25 = arith.constant 0.000000e+00 : f32
      %34 = vector.broadcast %cst_25 : f32 to vector<8x1xf32>
      %c0_26 = arith.constant 0 : index
      %c0_27 = arith.constant 0 : index
      %35 = vector.load %arg6[%c0_26, %c0_27] : memref<8x1xf32, #tpu.memory_space<vmem>>, vector<8x1xf32>
      tpu.vector_store %arg6[%c0_26, %c0_27], %34 {strides = array<i32>} : memref<8x1xf32, #tpu.memory_space<vmem>>, vector<8x1xf32>,
      %cst_28 = arith.constant 0.000000e+00 : f32
      %36 = vector.broadcast %cst_28 : f32 to vector<8x32xf32>
      %c0_29 = arith.constant 0 : index
      %c0_30 = arith.constant 0 : index
      %37 = vector.load %arg7[%c0_29, %c0_30] : memref<8x32xf32, #tpu.memory_space<vmem>>, vector<8x32xf32>
      tpu.vector_store %arg7[%c0_29, %c0_30], %36 {strides = array<i32>} : memref<8x32xf32, #tpu.memory_space<vmem>>, vector<8x32xf32>,
    } else {
    }
    %c0 = arith.constant 0 : index
    %c0_1 = arith.constant 0 : index
    %c0_2 = arith.constant 0 : index
    %3 = vector.load %arg2[%c0, %c0_1, %c0_2] : memref<1x16x32xf32, #tpu.memory_space<vmem>>, vector<1x16x32xf32>
    %4 = vector.shape_cast %3 : vector<1x16x32xf32> to vector<16x32xf32>
    %c0_3 = arith.constant 0 : index
    %c0_4 = arith.constant 0 : index
    %5 = vector.load %arg3[%c0_3, %c0_4] : memref<8x32xf32, #tpu.memory_space<vmem>>, vector<8x32xf32>
    %cst = arith.constant dense<0.000000e+00> : vector<8x16xf32>
    %6 = tpu.matmul %5, %4, %cst {dimension_numbers = #tpu.dot_dimension_numbers<[1], [1], [0], [0], [0, 0, 1, 0], [], []>} : vector<8x32xf32>, vector<16x32xf32>, vector<8x16xf32> -> vector<8x16xf32>
    %c0_5 = arith.constant 0 : index
    %c0_6 = arith.constant 0 : index
    %7 = vector.load %arg5[%c0_5, %c0_6] : memref<8x1xf32, #tpu.memory_space<vmem>>, vector<8x1xf32>
    %cst_7 = arith.constant dense<0xFF800000> : vector<8xf32>
    %8 = vector.multi_reduction <maximumf>, %6, %cst_7 [1] : vector<8x16xf32> to vector<8xf32>
    %9 = vector.shape_cast %8 : vector<8xf32> to vector<8x1xf32>
    %10 = arith.maximumf %7, %9 : vector<8x1xf32>
    %11 = arith.subf %7, %10 : vector<8x1xf32>
    %12 = math.exp %11 : vector<8x1xf32>
    %13 = vector.broadcast %10 : vector<8x1xf32> to vector<8x16xf32>
    %14 = arith.subf %6, %13 : vector<8x16xf32>
    %15 = math.exp %14 : vector<8x16xf32>
    %c0_8 = arith.constant 0 : index
    %c0_9 = arith.constant 0 : index
    %16 = vector.load %arg6[%c0_8, %c0_9] : memref<8x1xf32, #tpu.memory_space<vmem>>, vector<8x1xf32>
    %17 = arith.mulf %12, %16 : vector<8x1xf32>
    %cst_10 = arith.constant dense<0.000000e+00> : vector<8xf32>
    %18 = vector.multi_reduction <add>, %15, %cst_10 [1] : vector<8x16xf32> to vector<8xf32>
    %19 = vector.shape_cast %18 : vector<8xf32> to vector<8x1xf32>
    %20 = arith.addf %17, %19 : vector<8x1xf32>
    %c0_11 = arith.constant 0 : index
    %c0_12 = arith.constant 0 : index
    %21 = vector.load %arg6[%c0_11, %c0_12] : memref<8x1xf32, #tpu.memory_space<vmem>>, vector<8x1xf32>
    tpu.vector_store %arg6[%c0_11, %c0_12], %20 {strides = array<i32>} : memref<8x1xf32, #tpu.memory_space<vmem>>, vector<8x1xf32>,
    %c0_13 = arith.constant 0 : index
    %c0_14 = arith.constant 0 : index
    %22 = vector.load %arg7[%c0_13, %c0_14] : memref<8x32xf32, #tpu.memory_space<vmem>>, vector<8x32xf32>
    %23 = vector.broadcast %12 : vector<8x1xf32> to vector<8x32xf32>
    %24 = arith.mulf %23, %22 : vector<8x32xf32>
    %cst_15 = arith.constant dense<0.000000e+00> : vector<8x32xf32>
    %25 = tpu.matmul %15, %4, %cst_15 {dimension_numbers = #tpu.dot_dimension_numbers<[1], [0], [0], [1], [0, 0, 1, 1], [], []>} : vector<8x16xf32>, vector<16x32xf32>, vector<8x32xf32> -> vector<8x32xf32>
    %26 = arith.addf %24, %25 : vector<8x32xf32>
    %c0_16 = arith.constant 0 : index
    %c0_17 = arith.constant 0 : index
    %27 = vector.load %arg7[%c0_16, %c0_17] : memref<8x32xf32, #tpu.memory_space<vmem>>, vector<8x32xf32>
    tpu.vector_store %arg7[%c0_16, %c0_17], %26 {strides = array<i32>} : memref<8x32xf32, #tpu.memory_space<vmem>>, vector<8x32xf32>,
    %c0_18 = arith.constant 0 : index
    %c0_19 = arith.constant 0 : index
    %28 = vector.load %arg5[%c0_18, %c0_19] : memref<8x1xf32, #tpu.memory_space<vmem>>, vector<8x1xf32>
    tpu.vector_store %arg5[%c0_18, %c0_19], %10 {strides = array<i32>} : memref<8x1xf32, #tpu.memory_space<vmem>>, vector<8x1xf32>,
    %c0_i32_20 = arith.constant 0 : i32
    %29 = arith.cmpi eq, %arg1, %c0_i32_20 : i32
    %30 = arith.extui %29 : i1 to i32
    %c0_i32_21 = arith.constant 0 : i32
    %31 = arith.cmpi ne, %30, %c0_i32_21 : i32
    scf.if %31 {
      %c0_22 = arith.constant 0 : index
      %c0_23 = arith.constant 0 : index
      %32 = vector.load %arg6[%c0_22, %c0_23] : memref<8x1xf32, #tpu.memory_space<vmem>>, vector<8x1xf32>
      %33 = tpu.reciprocal %32 : vector<8x1xf32> -> vector<8x1xf32>
      %c0_24 = arith.constant 0 : index
      %c0_25 = arith.constant 0 : index
      %34 = vector.load %arg7[%c0_24, %c0_25] : memref<8x32xf32, #tpu.memory_space<vmem>>, vector<8x32xf32>
      %35 = vector.broadcast %33 : vector<8x1xf32> to vector<8x32xf32>
      %36 = arith.mulf %34, %35 : vector<8x32xf32>
      %c0_26 = arith.constant 0 : index
      %c0_27 = arith.constant 0 : index
      %c0_28 = arith.constant 0 : index
      %37 = vector.load %arg4[%c0_26, %c0_27, %c0_28] : memref<1x8x32xf32, #tpu.memory_space<vmem>>, vector<1x8x32xf32>
      %38 = vector.shape_cast %37 : vector<1x8x32xf32> to vector<8x32xf32>
      %39 = vector.shape_cast %36 : vector<8x32xf32> to vector<1x8x32xf32>
      tpu.vector_store %arg4[%c0_26, %c0_27, %c0_28], %39 {strides = array<i32>} : memref<1x8x32xf32, #tpu.memory_space<vmem>>, vector<1x8x32xf32>,
    } else {
    }
    return
  }
  func.func @transform_0(%arg0: i32, %arg1: i32) -> (i32, i32, i32) {
    %c0_i32 = arith.constant 0 : i32
    %c0_i32_0 = arith.constant 0 : i32
    return %arg0, %arg1, %c0_i32 : i32, i32, i32
  }
  func.func @transform_1(%arg0: i32, %arg1: i32) -> (i32, i32) {
    %c0_i32 = arith.constant 0 : i32
    %c0_i32_0 = arith.constant 0 : i32
    %c0_i32_1 = arith.constant 0 : i32
    return %c0_i32, %c0_i32_0 : i32, i32
  }
  func.func @transform_2(%arg0: i32, %arg1: i32) -> (i32, i32, i32) {
    %c0_i32 = arith.constant 0 : i32
    %c0_i32_0 = arith.constant 0 : i32
    %c0_i32_1 = arith.constant 0 : i32
    return %arg0, %c0_i32, %c0_i32_0 : i32, i32, i32
  }
}

</mosaic_0001>

<llo_original>
// kernel: tpu_custom_call.1
$region0: #{tpu_custom_call.1}
  #allocation0 [shape = 'u32[]', space=smem, size = 0x4, offset = 0x4, fixed_abs, tag = 'smem constant byte address 0x4 - core index']
  #allocation1 [shape = 'u32[144,128]{1,0:T(1,128)}', space=vmem, size = 0x12000, scoped, tag = 'internal scratch']
  #allocation2 [shape = 'f32[8,1]{1,0:T(8,128)}', space=vmem, size = 0x1000, scoped, tag = 'scratch operand']
  #allocation3 [shape = 'f32[8,1]{1,0:T(8,128)}', space=vmem, size = 0x1000, scoped, tag = 'scratch operand']
  #allocation4 [shape = 'f32[8,32]{1,0:T(8,128)}', space=vmem, size = 0x1000, scoped, tag = 'scratch operand']
  %s0 = inlined_call_operand.hbm [shape: f32[2,16,32], index: 0, kind: input, shape index: {}]
  %s1 = inlined_call_operand.hbm [shape: f32[8,32], index: 1, kind: input, shape index: {}]
  %s2 = inlined_call_operand.hbm [shape: f32[2,8,32], index: 2, kind: output, shape index: {}]
  %s3 = sld [smem:[#allocation0]]
  $region57: #{tpu_custom_call.1} parent=0
    _
  %s5 = ssub.s32 1, %s3
  %s6 = scalar_select 0, %s5, %s3
  $region1: #{tpu_custom_call.1} parent=0
    #allocation5 [shape = 'u8[16384]{0}', space=vmem, size = 0x4000, scoped, tag = 'input window, operand 0']
    #allocation6 [shape = 's32[2]{0}', space=sflag, size = 0x8, scoped, tag = 'scoped memory for tpu_custom_call.1']
    #allocation7 [shape = 's32[2]{0}', space=sflag, size = 0x8, scoped, tag = 'scoped memory for tpu_custom_call.1']
    #allocation8 [shape = 'u8[4096]{0}', space=vmem, size = 0x1000, scoped, tag = 'input window, operand 1, single buffered']
    #allocation9 [shape = 's32[1]{0}', space=sflag, size = 0x4, scoped, tag = 'scoped memory for tpu_custom_call.1']
    #allocation10 [shape = 'u8[8192]{0}', space=vmem, size = 0x2000, scoped, tag = 'output window, operand 0']
    %7 = vsyncpa [#allocation6], 0
    %s8 = scalar_lea.sflag [#allocation6], 1
    %9 = vsyncpa %s8, 0
    %10 = vsyncpa [#allocation9], 0
    %11 = vsyncpa [#allocation7], 0
    %s12 = scalar_lea.sflag [#allocation7], 1
    %13 = vsyncpa %s12, 0
    loop: start=0, step=1, limit=4
    $region2: #{tpu_custom_call.1} parent=1 // loop_pre_header
      _
    $region3: #{tpu_custom_call.1} parent=1 // loop_header
      %s15 = sphi 0, %s19
      %p16 = scmp.ge.s32.totalorder %s15, 4
      %s22 = sphi 0, %s34
      %s23 = sphi 0, %s30
      %s24 = sphi 0, %s22
      %s25 = sphi 0, %s23
      %s26 = sphi 0, %s24
      %s27 = sphi 0, %s25
      %s39 = sphi 0, %s41
      %s42 = sphi 0, %s39
      %s43 = sphi 0, %s42
      %s59 = sphi 0, %s43
      %s63 = sphi 0, %s63
      %s65 = sphi 0, %s63
      %s66 = sphi 0, %s65
      %s80 = sphi 0, %s66
      %s86 = sphi 0, %s88
      %s89 = sphi 0, %s86
      %s90 = sphi 0, %s89
      %s106 = sphi 0, %s90
    $region4: #{tpu_custom_call.1} parent=1 // loop_header_branch
      %18 = sbr.rel (%p16) target = $region8
    $region5: #{tpu_custom_call.1} parent=1 // loop_body
      %s20 = ssub.s32 %s15, 1
      %s21 = ssub.s32 %s15, 2
      %s28 = sadd.s32 1, %s23
      %p29 = scmp.ge.s32.totalorder %s28, 1
      %s30 = scalar_select %p29, 0, %s28
      %s31 = sadd.s32 1, %s22
      %s32 = scalar_select %p29, %s31, %s22
      %p33 = scmp.ge.s32.totalorder %s32, 2
      %s34 = scalar_select %p33, 0, %s32
      %s35 = ssub.s32 %s22, %s34
      %s36 = ssub.s32 %s23, %s30
      %s37 = sor.u32 %s35, %s36
      %p38 = scmp.eq.s32.totalorder %s37, 0
      %s40 = sadd.s32 %s39, 1
      %s41 = scalar_select %p38, %s39, %s40
      %p44 = pneg %p38
      %p45 = scmp.eq.s32.totalorder %s15, 1
      %p46 = por %p44, %p45
      %p47 = scmp.ne.s32.totalorder %s39, %s42
      %p48 = scmp.eq.s32.totalorder %s15, 0
      %p49 = por %p47, %p48
      %p50 = scmp.ne.s32.totalorder %s39, %s42
      %p51 = scmp.eq.s32.totalorder %s20, 1
      %p52 = por %p50, %p51
      %p53 = scmp.ne.s32.totalorder %s42, %s43
      %p54 = scmp.eq.s32.totalorder %s20, 0
      %p55 = por %p53, %p54
      %p56 = scmp.ne.s32.totalorder %s42, %s43
      %p57 = scmp.eq.s32.totalorder %s21, 1
      %p58 = por %p56, %p57
      %p60 = scmp.ne.s32.totalorder %s43, %s59
      %p61 = scmp.eq.s32.totalorder %s21, 0
      %p62 = por %p60, %p61
      %s64 = sadd.s32 %s63, 1
      %p67 = scmp.eq.s32.totalorder %s15, 1
      %p68 = scmp.ne.s32.totalorder %s63, %s65
      %p69 = scmp.eq.s32.totalorder %s15, 0
      %p70 = por %p68, %p69
      %p71 = scmp.ne.s32.totalorder %s63, %s65
      %p72 = scmp.eq.s32.totalorder %s20, 1
      %p73 = por %p71, %p72
      %p74 = scmp.ne.s32.totalorder %s65, %s66
      %p75 = scmp.eq.s32.totalorder %s20, 0
      %p76 = por %p74, %p75
      %p77 = scmp.ne.s32.totalorder %s65, %s66
      %p78 = scmp.eq.s32.totalorder %s21, 1
      %p79 = por %p77, %p78
      %p81 = scmp.ne.s32.totalorder %s66, %s80
      %p82 = scmp.eq.s32.totalorder %s21, 0
      %p83 = por %p81, %p82
      %s84 = ssub.s32 %s22, %s34
      %p85 = scmp.eq.s32.totalorder %s84, 0
      %s87 = sadd.s32 %s86, 1
      %s88 = scalar_select %p85, %s86, %s87
      %p91 = pneg %p85
      %p92 = scmp.eq.s32.totalorder %s15, 1
      %p93 = por %p91, %p92
      %p94 = scmp.ne.s32.totalorder %s86, %s89
      %p95 = scmp.eq.s32.totalorder %s15, 0
      %p96 = por %p94, %p95
      %p97 = scmp.ne.s32.totalorder %s86, %s89
      %p98 = scmp.eq.s32.totalorder %s20, 1
      %p99 = por %p97, %p98
      %p100 = scmp.ne.s32.totalorder %s89, %s90
      %p101 = scmp.eq.s32.totalorder %s20, 0
      %p102 = por %p100, %p101
      %p103 = scmp.ne.s32.totalorder %s89, %s90
      %p104 = scmp.eq.s32.totalorder %s21, 1
      %p105 = por %p103, %p104
      %p107 = scmp.ne.s32.totalorder %s90, %s106
      %p108 = scmp.eq.s32.totalorder %s21, 0
      %p109 = por %p107, %p108
      %p110 = scmp.le.s32.totalorder 1, %s15
      %p111 = scmp.lt.s32.totalorder %s15, 3
      %p112 = pnand %p110, %p111
      %p113 = pneg %p112
      // Predicated region
      $region9: #{tpu_custom_call.1} parent=5 // pred_check
        _
      $region10: #{tpu_custom_call.1} parent=5 // pred_check_branch
        %115 = sbr.rel (%p112) target = $region12
      $region11: #{tpu_custom_call.1} parent=5 // pred_region
        %s116 = ssub.s32 %s15, 1
        // Predicated region
        $region13: #{tpu_custom_call.1} parent=11 // pred_check
          %p117 = pneg %p76
        $region14: #{tpu_custom_call.1} parent=11 // pred_check_branch
          %119 = sbr.rel (%p117) target = $region16
        $region15: #{tpu_custom_call.1} parent=11 // pred_region
          %s121 = ssub.s32 128, 128
          %122 = vsyncadd [#allocation9], %s121
          %s124 = sshll.u32 [#allocation8], 4
          %s125 = int_to_ptr.vmem [resolvable:$true] %s124
          %127 = dma.hbm_to_vmem [thread:$0]  %s1, 128, %s125, [#allocation9]
        $region16: #{tpu_custom_call.1} parent=11 // pred_fallthru
          _
      $region12: #{tpu_custom_call.1} parent=5 // pred_fallthru
        _
      %p128 = scmp.lt.s32.totalorder %s15, 2
      // Predicated region
      $region17: #{tpu_custom_call.1} parent=5 // pred_check
        %p129 = pneg %p128
      $region18: #{tpu_custom_call.1} parent=5 // pred_check_branch
        %131 = sbr.rel (%p129) target = $region20
      $region19: #{tpu_custom_call.1} parent=5 // pred_region
        // Predicated region
        $region21: #{tpu_custom_call.1} parent=19 // pred_check
          %p132 = pneg %p49
        $region22: #{tpu_custom_call.1} parent=19 // pred_check_branch
          %134 = sbr.rel (%p132) target = $region24
        $region23: #{tpu_custom_call.1} parent=19 // pred_region
          %s135 = sand.u32 %s39, 1
          %s136 = scalar_lea.sflag [#allocation6], %s135
          %s137 = sand.u32 %s39, 1
          %s138 = smul.addr %s137, 16
          %s139 = scalar_lea.vmem [#allocation5], %s138
          %s140 = smul.u32 2, %s23
          %s142 = ssub.s32 256, 256
          %143 = vsyncadd %s136, %s142
          %s144 = smul.addr %s22, 2
          %s145 = sadd.s32 %s140, %s144
          %s146 = smul.addr %s145, 128
          %s147 = scalar_lea.hbm %s0, %s146
          %s148 = sshll.u32 %s139, 4
          %s149 = int_to_ptr.vmem [resolvable:$true] %s148
          %154 = dma.hbm_to_vmem [thread:$0]  %s147, 256, %s149, %s136, 128, 128, 8
        $region24: #{tpu_custom_call.1} parent=19 // pred_fallthru
          _
      $region20: #{tpu_custom_call.1} parent=5 // pred_fallthru
        _
      %p155 = scmp.le.s32.totalorder 1, %s15
      %p156 = scmp.lt.s32.totalorder %s15, 3
      %p157 = pnand %p155, %p156
      %p158 = pneg %p157
      // Predicated region
      $region25: #{tpu_custom_call.1} parent=5 // pred_check
        _
      $region26: #{tpu_custom_call.1} parent=5 // pred_check_branch
        %160 = sbr.rel (%p157) target = $region28
      $region27: #{tpu_custom_call.1} parent=5 // pred_region
        %s161 = ssub.s32 %s15, 1
        %s162 = sand.u32 %s42, 1
        %s163 = scalar_lea.sflag [#allocation6], %s162
        %s164 = sand.u32 %s42, 1
        %s165 = smul.addr %s164, 16
        %s166 = scalar_lea.vmem [#allocation5], %s165
        // Predicated region
        $region29: #{tpu_custom_call.1} parent=27 // pred_check
          %p167 = pneg %p55
        $region30: #{tpu_custom_call.1} parent=27 // pred_check_branch
          %169 = sbr.rel (%p167) target = $region32
        $region31: #{tpu_custom_call.1} parent=27 // pred_region
          %170 = dma.done %s163, 256
        $region32: #{tpu_custom_call.1} parent=27 // pred_fallthru
          _
        // Predicated region
        $region33: #{tpu_custom_call.1} parent=27 // pred_check
          %p171 = pneg %p76
        $region34: #{tpu_custom_call.1} parent=27 // pred_check_branch
          %173 = sbr.rel (%p171) target = $region36
        $region35: #{tpu_custom_call.1} parent=27 // pred_region
          %174 = dma.done [#allocation9], 128
        $region36: #{tpu_custom_call.1} parent=27 // pred_fallthru
          _
        %s175 = sand.u32 %s42, 1
        %s176 = scalar_lea.sflag [#allocation6], %s175
        %s177 = sand.u32 %s42, 1
        %s178 = smul.addr %s177, 16
        %s179 = scalar_lea.vmem [#allocation5], %s178
        %p180 = pneg %p55
        %p181 = pneg %p52
        %p182 = pneg %p76
        %p183 = pneg %p73
        %p184 = pneg %p102
        %p185 = pneg %p99
        %s186 = sand.u32 %s89, 1
        %s187 = scalar_lea.sflag [#allocation7], %s186
        %s188 = sand.u32 %s89, 1
        %s189 = smul.addr %s188, 8
        %s190 = scalar_lea.vmem [#allocation10], %s189
        %s191 = smul.u32 2, %s25
        %p192 = scmp.eq.s32.totalorder %s25, 0
        // Predicated region
        $region37: #{tpu_custom_call.1} parent=27 // pred_check
          %p193 = pneg %p192
        $region38: #{tpu_custom_call.1} parent=27 // pred_check_branch
          %195 = sbr.rel (%p193) target = $region40
        $region39: #{tpu_custom_call.1} parent=27 // pred_region
          %vm196 = vcmask 7168
          %197 = vst.msk [vmem:[#allocation2] sm:$0xff] %vm196, -inf
          %198 = vst.msk [vmem:[#allocation3] sm:$0xff] %vm196, 0.0
          %vm199 = vcmask 261120
          %200 = vst.msk [vmem:[#allocation4] sm:$0xff] %vm199, 0.0
        $region40: #{tpu_custom_call.1} parent=27 // pred_fallthru
          _
        %v201 = vld [vmem:[%s166] sm:$0xff]
        %v202 = vld [vmem:[%s166 + $0x8] sm:$0xff]
        %v203 = vld [vmem:[#allocation8] sm:$0xff]
        %vm204 = vcmask 261120
        %v206 = vsel %vm204, %v203, 0
        %v209 = vsel %vm204, %v201, 0
        %v212 = vsel %vm204, %v202, 0
        %214 = vmatprep.subr.mxu0 0.0
        %215 = vmatpush1.xpose.msra.mxu0 0.0
        %216 = vmatprep.subr.mxu0 0.0
        %217 = vmatpush1.xpose.msra.mxu0 0.0
        %218 = vmatprep.subr.mxu0 0.0
        %219 = vmatpush1.xpose.msra.mxu0 0.0
        %220 = vmatprep.subr.mxu0 0.0
        %221 = vmatpush1.xpose.msra.mxu0 0.0
        %222 = vmatprep.subr.mxu0 0.0
        %223 = vmatpush1.xpose.msra.mxu0 0.0
        %224 = vmatprep.subr.mxu0 0.0
        %225 = vmatpush1.xpose.msra.mxu0 0.0
        %226 = vmatprep.subr.mxu0 0.0
        %227 = vmatpush1.xpose.msra.mxu0 0.0
        %228 = vmatprep.subr.mxu0 0.0
        %229 = vmatpush1.xpose.msra.mxu0 0.0
        %230 = vmatprep.subr.mxu0 0.0
        %231 = vmatpush1.xpose.msra.mxu0 0.0
        %232 = vmatprep.subr.mxu0 0.0
        %233 = vmatpush1.xpose.msra.mxu0 0.0
        %234 = vmatprep.subr.mxu0 0.0
        %235 = vmatpush1.xpose.msra.mxu0 0.0
        %236 = vmatprep.subr.mxu0 0.0
        %237 = vmatpush1.xpose.msra.mxu0 0.0
        %238 = vmatprep.subr.mxu0 0.0
        %239 = vmatpush1.xpose.msra.mxu0 0.0
        %240 = vmatprep.subr.mxu0 0.0
        %241 = vmatpush1.xpose.msra.mxu0 0.0
        %242 = vmatprep.subr.mxu0 0.0
        %243 = vmatpush1.xpose.msra.mxu0 %v212
        %244 = vmatprep.subr.mxu0 0.0
        %245 = vmatpush1.xpose.msra.mxu0 %v209
        %246 = vmatprep.subr.mxu0 0.0
        %247 = vmatpush2.xpose.msra.mxu0 0.0
        %248 = vmatprep.subr.mxu0 0.0
        %249 = vmatpush2.xpose.msra.mxu0 0.0
        %250 = vmatprep.subr.mxu0 0.0
        %251 = vmatpush2.xpose.msra.mxu0 0.0
        %252 = vmatprep.subr.mxu0 0.0
        %253 = vmatpush2.xpose.msra.mxu0 0.0
        %254 = vmatprep.subr.mxu0 0.0
        %255 = vmatpush2.xpose.msra.mxu0 0.0
        %256 = vmatprep.subr.mxu0 0.0
        %257 = vmatpush2.xpose.msra.mxu0 0.0
        %258 = vmatprep.subr.mxu0 0.0
        %259 = vmatpush2.xpose.msra.mxu0 0.0
        %260 = vmatprep.subr.mxu0 0.0
        %261 = vmatpush2.xpose.msra.mxu0 0.0
        %262 = vmatprep.subr.mxu0 0.0
        %263 = vmatpush2.xpose.msra.mxu0 0.0
        %264 = vmatprep.subr.mxu0 0.0
        %265 = vmatpush2.xpose.msra.mxu0 0.0
        %266 = vmatprep.subr.mxu0 0.0
        %267 = vmatpush2.xpose.msra.mxu0 0.0
        %268 = vmatprep.subr.mxu0 0.0
        %269 = vmatpush2.xpose.msra.mxu0 0.0
        %270 = vmatprep.subr.mxu0 0.0
        %271 = vmatpush2.xpose.msra.mxu0 0.0
        %272 = vmatprep.subr.mxu0 0.0
        %273 = vmatpush2.xpose.msra.mxu0 0.0
        %274 = vmatprep.subr.mxu0 0.0
        %275 = vmatpush2.xpose.msra.mxu0 0.0
        %276 = vmatprep.subr.mxu0 0.0
        %277 = vmatpush2.xpose.msra.mxu0 0.0
        %278 = vmatprep.mubr.f32.mxu0 0.0
        %279 = vmatmul.mubr.f32.gmra.mxu0 %v206
        %v280 = vpop.f32.mrf.mxu0
        %v281 = vadd.f32 0.0, %v280
        %v282 = vpop.f32.mrf.mxu0
        %283 = vdwg.mxu0
        %v284 = vld [vmem:[#allocation2] sm:$0xff]
        %vm285 = vcmask 130048
        %v286 = vsel %vm285, %v281, -inf
        %287 = vmax.xlane.f32.xlu0 %v286
        %v288 = vpop.xlane.xlu0 %287
        %v289 = vmax.f32 %v284, %v288
        %v290 = vsub.f32 %v284, %v289
        %v291 = vmul.f32 %v290, 1.442695
        %v292 = vpow.pop %v291
        %294 = vset.pattern.permute.xlu0 0
        %295 = vperm.xlu0 %294, %v289
        %v296 = vpop.permute.xlu0 %295
        %v298 = vsub.f32 %v281, %v296
        %v299 = vmul.f32 %v298, 1.442695
        %v300 = vpow.pop %v299
        %v301 = vld [vmem:[#allocation3] sm:$0xff]
        %v302 = vmul.f32 %v292, %v301
        %v303 = vsel %vm285, %v300, 0.0
        %304 = vadd.xlane.f32.xlu0 %v303
        %v305 = vpop.xlane.xlu0 %304
        %v306 = vadd.f32 %v302, %v305
        %vm307 = vcmask 7168
        %308 = vst.msk [vmem:[#allocation3] sm:$0xff] %vm307, %v306
        %v309 = vld [vmem:[#allocation4] sm:$0xff]
        %311 = vset.pattern.permute.xlu0 0
        %312 = vperm.xlu0 %311, %v292
        %v313 = vpop.permute.xlu0 %312
        %v315 = vmul.f32 %v313, %v309
        %v317 = vsel %vm285, %v300, 0
        %319 = vmatprep.subr.mxu0 0.0
        %320 = vmatpush1.msra.mxu0 0.0
        %321 = vmatprep.subr.mxu0 0.0
        %322 = vmatpush1.msra.mxu0 0.0
        %323 = vmatprep.subr.mxu0 0.0
        %324 = vmatpush1.msra.mxu0 0.0
        %325 = vmatprep.subr.mxu0 0.0
        %326 = vmatpush1.msra.mxu0 0.0
        %327 = vmatprep.subr.mxu0 0.0
        %328 = vmatpush1.msra.mxu0 0.0
        %329 = vmatprep.subr.mxu0 0.0
        %330 = vmatpush1.msra.mxu0 0.0
        %331 = vmatprep.subr.mxu0 0.0
        %332 = vmatpush1.msra.mxu0 0.0
        %333 = vmatprep.subr.mxu0 0.0
        %334 = vmatpush1.msra.mxu0 0.0
        %335 = vmatprep.subr.mxu0 0.0
        %336 = vmatpush1.msra.mxu0 0.0
        %337 = vmatprep.subr.mxu0 0.0
        %338 = vmatpush1.msra.mxu0 0.0
        %339 = vmatprep.subr.mxu0 0.0
        %340 = vmatpush1.msra.mxu0 0.0
        %341 = vmatprep.subr.mxu0 0.0
        %342 = vmatpush1.msra.mxu0 0.0
        %343 = vmatprep.subr.mxu0 0.0
        %344 = vmatpush1.msra.mxu0 0.0
        %345 = vmatprep.subr.mxu0 0.0
        %346 = vmatpush1.msra.mxu0 0.0
        %347 = vmatprep.subr.mxu0 0.0
        %348 = vmatpush1.msra.mxu0 %v202
        %349 = vmatprep.subr.mxu0 0.0
        %350 = vmatpush1.msra.mxu0 %v201
        %351 = vmatprep.subr.mxu0 0.0
        %352 = vmatpush2.msra.mxu0 0.0
        %353 = vmatprep.subr.mxu0 0.0
        %354 = vmatpush2.msra.mxu0 0.0
        %355 = vmatprep.subr.mxu0 0.0
        %356 = vmatpush2.msra.mxu0 0.0
        %357 = vmatprep.subr.mxu0 0.0
        %358 = vmatpush2.msra.mxu0 0.0
        %359 = vmatprep.subr.mxu0 0.0
        %360 = vmatpush2.msra.mxu0 0.0
        %361 = vmatprep.subr.mxu0 0.0
        %362 = vmatpush2.msra.mxu0 0.0
        %363 = vmatprep.subr.mxu0 0.0
        %364 = vmatpush2.msra.mxu0 0.0
        %365 = vmatprep.subr.mxu0 0.0
        %366 = vmatpush2.msra.mxu0 0.0
        %367 = vmatprep.subr.mxu0 0.0
        %368 = vmatpush2.msra.mxu0 0.0
        %369 = vmatprep.subr.mxu0 0.0
        %370 = vmatpush2.msra.mxu0 0.0
        %371 = vmatprep.subr.mxu0 0.0
        %372 = vmatpush2.msra.mxu0 0.0
        %373 = vmatprep.subr.mxu0 0.0
        %374 = vmatpush2.msra.mxu0 0.0
        %375 = vmatprep.subr.mxu0 0.0
        %376 = vmatpush2.msra.mxu0 0.0
        %377 = vmatprep.subr.mxu0 0.0
        %378 = vmatpush2.msra.mxu0 0.0
        %379 = vmatprep.subr.mxu0 0.0
        %380 = vmatpush2.msra.mxu0 0.0
        %381 = vmatprep.subr.mxu0 0.0
        %382 = vmatpush2.msra.mxu0 0.0
        %383 = vmatprep.mubr.f32.mxu0 0.0
        %384 = vmatmul.mubr.f32.gmra.mxu0 %v317
        %v385 = vpop.f32.mrf.mxu0
        %v386 = vadd.f32 0.0, %v385
        %v387 = vpop.f32.mrf.mxu0
        %388 = vdwg.mxu0
        %v389 = vadd.f32 %v315, %v386
        %390 = vst.msk [vmem:[#allocation4] sm:$0xff] %vm204, %v389
        %391 = vst.msk [vmem:[#allocation2] sm:$0xff] %vm307, %v289
        // Predicated region
        $region41: #{tpu_custom_call.1} parent=27 // pred_check
          %p392 = pneg %p192
        $region42: #{tpu_custom_call.1} parent=27 // pred_check_branch
          %394 = sbr.rel (%p392) target = $region44
        $region43: #{tpu_custom_call.1} parent=27 // pred_region
          %v395 = vld [vmem:[#allocation3] sm:$0xff]
          %v396 = vrcp.pop %v395
          %v397 = vld [vmem:[#allocation4] sm:$0xff]
          %399 = vset.pattern.permute.xlu0 0
          %400 = vperm.xlu0 %399, %v396
          %v401 = vpop.permute.xlu0 %400
          %v403 = vmul.f32 %v397, %v401
          %404 = vst.msk [vmem:[%s190] sm:$0xff] %vm204, %v403
        $region44: #{tpu_custom_call.1} parent=27 // pred_fallthru
          _
        %s405 = sand.u32 %s89, 1
        %s406 = scalar_lea.sflag [#allocation7], %s405
        %s407 = sand.u32 %s89, 1
        %s408 = smul.addr %s407, 8
        %s409 = scalar_lea.vmem [#allocation10], %s408
        // Predicated region
        $region45: #{tpu_custom_call.1} parent=27 // pred_check
          %p410 = pneg %p99
        $region46: #{tpu_custom_call.1} parent=27 // pred_check_branch
          %412 = sbr.rel (%p410) target = $region48
        $region47: #{tpu_custom_call.1} parent=27 // pred_region
          %s414 = ssub.s32 128, 128
          %415 = vsyncadd %s406, %s414
          %s416 = smul.addr %s24, 128
          %s417 = scalar_lea.hbm %s2, %s416
          %s419 = sshll.u32 %s409, 4
          %s420 = int_to_ptr.vmem [resolvable:$true] %s419
          %422 = dma.vmem_to_hbm [thread:$0]  %s420, 128, %s417, %s406
        $region48: #{tpu_custom_call.1} parent=27 // pred_fallthru
          _
      $region28: #{tpu_custom_call.1} parent=5 // pred_fallthru
        _
      %p423 = scmp.le.s32.totalorder 2, %s15
      // Predicated region
      $region49: #{tpu_custom_call.1} parent=5 // pred_check
        %p424 = pneg %p423
      $region50: #{tpu_custom_call.1} parent=5 // pred_check_branch
        %426 = sbr.rel (%p424) target = $region52
      $region51: #{tpu_custom_call.1} parent=5 // pred_region
        %s427 = ssub.s32 %s15, 2
        // Predicated region
        $region53: #{tpu_custom_call.1} parent=51 // pred_check
          %p428 = pneg %p105
        $region54: #{tpu_custom_call.1} parent=51 // pred_check_branch
          %430 = sbr.rel (%p428) target = $region56
        $region55: #{tpu_custom_call.1} parent=51 // pred_region
          %s431 = sand.u32 %s90, 1
          %s432 = scalar_lea.sflag [#allocation7], %s431
          %s433 = sand.u32 %s90, 1
          %s434 = smul.addr %s433, 8
          %s435 = scalar_lea.vmem [#allocation10], %s434
          %436 = dma.done %s432, 128
        $region56: #{tpu_custom_call.1} parent=51 // pred_fallthru
          _
      $region52: #{tpu_custom_call.1} parent=5 // pred_fallthru
        _
    $region6: #{tpu_custom_call.1} parent=1 // loop_footer
      %s19 = sadd.s32 1, %s15
    $region7: #{tpu_custom_call.1} parent=1 // loop_footer_branch
      %14 = sbr.rel target = $region3
    $region8: #{tpu_custom_call.1} parent=1 // loop_exit
      _
    %437 = vsyncpa [#allocation6], 1
    %s438 = scalar_lea.sflag [#allocation6], 1
    %439 = vsyncpa %s438, 1
    %440 = vsyncpa [#allocation9], 1
    %441 = vsyncpa [#allocation7], 1
    %s442 = scalar_lea.sflag [#allocation7], 1
    %443 = vsyncpa %s442, 1

</llo_original>
